<compile_context>
chip_gen: v7x
topology: tpu7x:2x2x1
jax: 0.10.0
libtpu: 0.0.40
codegen_flags: <defaults>
</compile_context>

<pallas_src>
import math
import functools

import jax
import jax.numpy as jnp
from jax import lax
from jax.experimental import pallas as pl
from jax.experimental.pallas import tpu as pltpu

NEG = 1.0e12  # the '-inf' substitute used by sequence_masking / add_mask_tril


# ----------------------------------------------------------------------------
# Pallas kernel: GlobalPointer forward for one (batch, head) grid point.
# ----------------------------------------------------------------------------
def _gp_head_kernel(x_ref, mask_m_ref, mask_n_ref,
                    wq_ref, wk_ref, bq_ref, bk_ref,
                    cos_ref, sin_ref,
                    out_ref,
                    keep_ref, cadd_ref,
                    *, head_size):
    D = head_size
    S = x_ref.shape[1]
    negs = NEG / math.sqrt(D)            # scale is folded into Wq/bq, so the
    h = pl.program_id(1)                 # additive mask constant carries it too

    # ---- once per batch element: combined multiplicative / additive mask ----
    @pl.when(h == 0)
    def _():
        mm = mask_m_ref[0]               # (S, 1)
        mn = mask_n_ref[0]               # (1, S)
        keep = mm * mn                   # (S, S): 1 where both positions valid
        row = lax.broadcasted_iota(jnp.int32, (S, S), 0)
        col = lax.broadcasted_iota(jnp.int32, (S, S), 1)
        tril = (row > col).astype(jnp.float32)   # strict lower triangle
        keep_ref[...] = keep
        cadd_ref[...] = -negs * (1.0 - keep + tril)

    # ---- per-head projection (bf16 on the MXU, f32 accumulation) ----
    x = x_ref[0]                                                       # (S, H) bf16
    q = jnp.dot(x, wq_ref[0], preferred_element_type=jnp.float32) + bq_ref[0]
    k = jnp.dot(x, wk_ref[0], preferred_element_type=jnp.float32) + bk_ref[0]

    # ---- RoPE in rotate-half layout: one lane roll + FMA (sign folded in sin)
    cos = cos_ref[...]                                                 # (S, D)
    sin = sin_ref[...]                                                 # (S, D) signed
    qr = q * cos + pltpu.roll(q, D // 2, 1) * sin
    kr = k * cos + pltpu.roll(k, D // 2, 1) * sin

    # ---- q . k^T, contracting last-vs-last dims (no explicit transpose) ----
    lg = lax.dot_general(qr.astype(jnp.bfloat16), kr.astype(jnp.bfloat16),
                         (((1,), (1,)), ((), ())),
                         preferred_element_type=jnp.float32)           # (S, S)

    # ---- masked + scaled logits: a single FMA per head ----
    out_ref[0, 0] = lg * keep_ref[...] + cadd_ref[...]


def global_pointer_pallas(hidden, attention_mask, Wq, Wk, bq, bk, cos_p, sin_p,
                          *, heads, head_size):
    B, S, H = hidden.shape
    D = head_size
    x = hidden.astype(jnp.bfloat16)                 # bf16 activations for the MXU
    maskf = attention_mask.astype(jnp.float32)
    mask_m = maskf.reshape(B, S, 1)                 # masks rows (m axis)
    mask_n = maskf.reshape(B, 1, S)                 # masks cols (n axis)

    kernel = functools.partial(_gp_head_kernel, head_size=D)

    return pl.pallas_call(
        kernel,
        out_shape=jax.ShapeDtypeStruct((B, heads, S, S), jnp.float32),
        grid_spec=pltpu.PrefetchScalarGridSpec(
            num_scalar_prefetch=0,
            grid=(B, heads),
            in_specs=[
                pl.BlockSpec((1, S, H), lambda b, h: (b, 0, 0)),   # x (bf16)
                pl.BlockSpec((1, S, 1), lambda b, h: (b, 0, 0)),   # mask rows
                pl.BlockSpec((1, 1, S), lambda b, h: (b, 0, 0)),   # mask cols
                pl.BlockSpec((1, H, D), lambda b, h: (h, 0, 0)),   # Wq head slice
                pl.BlockSpec((1, H, D), lambda b, h: (h, 0, 0)),   # Wk head slice
                pl.BlockSpec((1, 1, D), lambda b, h: (h, 0, 0)),   # bq head slice
                pl.BlockSpec((1, 1, D), lambda b, h: (h, 0, 0)),   # bk head slice
                pl.BlockSpec((S, D), lambda b, h: (0, 0)),         # cos table
                pl.BlockSpec((S, D), lambda b, h: (0, 0)),         # sin*sign table
            ],
            out_specs=pl.BlockSpec((1, 1, S, S), lambda b, h: (b, h, 0, 0)),
            scratch_shapes=[pltpu.VMEM((S, S), jnp.float32),       # keep mask
                            pltpu.VMEM((S, S), jnp.float32)],      # additive mask
        ),
        compiler_params=pltpu.CompilerParams(
            dimension_semantics=("parallel", "arbitrary")),
    )(x, mask_m, mask_n, Wq, Wk, bq, bk, cos_p, sin_p)


# ----------------------------------------------------------------------------
# Host-side parameter preparation (deterministic, done once).
# ----------------------------------------------------------------------------
def prepare_global_pointer_params(W, b, seq_len, heads, head_size):
    """Split the fused linear into per-head q/k params, permute the feature dim
    from interleaved RoPE layout to rotate-half layout, fold in 1/sqrt(D), and
    build the (S, D) cos / signed-sin tables."""
    H = W.shape[0]
    D = head_size
    scale = 1.0 / math.sqrt(D)
    # interleaved -> rotate-half: even feature indices first, then odd.
    perm = jnp.concatenate([jnp.arange(0, D, 2), jnp.arange(1, D, 2)])

    Wv = W.reshape(H, heads, 2 * D)
    Wq = jnp.transpose(Wv[:, :, :D][:, :, perm], (1, 0, 2)) * scale   # (heads,H,D)
    Wk = jnp.transpose(Wv[:, :, D:][:, :, perm], (1, 0, 2))           # (heads,H,D)
    bv = b.reshape(heads, 2 * D)
    bq = (bv[:, :D][:, perm] * scale).reshape(heads, 1, D)
    bk = bv[:, D:][:, perm].reshape(heads, 1, D)

    # RoPE tables (torch .repeat(...,2) concatenates -> jnp.tile), then permute
    # to the rotate-half layout; the rotation sign pattern is folded into sin.
    theta = jnp.power(10000.0, -2.0 * jnp.arange(D // 2, dtype=jnp.float32) / D)
    ang = jnp.arange(seq_len, dtype=jnp.float32)[:, None] * theta[None, :]  # (S, D/2)
    cos_full = jnp.tile(jnp.cos(ang), (1, 2))      # cos_pos[j] = cos(ang[j % (D/2)])
    sin_full = jnp.tile(jnp.sin(ang), (1, 2))
    sign = jnp.concatenate([-jnp.ones((D // 2,), jnp.float32),
                            jnp.ones((D // 2,), jnp.float32)])
    cos_p = cos_full[:, perm]
    sin_p = sin_full[:, perm] * sign[None, :]

    return (Wq.astype(jnp.bfloat16), Wk.astype(jnp.bfloat16),
            bq.astype(jnp.float32), bk.astype(jnp.float32),
            cos_p.astype(jnp.float32), sin_p.astype(jnp.float32))


def synthetic_bert_encoder(input_ids, token_type_ids, word_emb, type_emb, pos_emb):
    # TODO(synk): pretrained BertModel encoder has no clean Pallas equivalent here;
    # replaced by a deterministic embedding sum that produces last_hidden_state (B,S,H).
    return word_emb[input_ids] + type_emb[token_type_ids] + pos_emb[None, :, :]


def torch_like_reference(x, mask, W, b, heads, head_size):
    """Pure-JAX replica of GlobalPointer.forward + add_mask_tril (torch semantics)."""
    B, S, H = x.shape
    D = head_size
    proj = x @ W + b                                   # (B, S, heads*2D)
    proj = proj.reshape(B, S, heads, 2 * D)
    qw, kw = proj[..., :D], proj[..., D:]
    theta = jnp.power(10000.0, -2.0 * jnp.arange(D // 2, dtype=jnp.float32) / D)
    ang = jnp.arange(S, dtype=jnp.float32)[:, None] * theta[None, :]
    pos = jnp.stack([jnp.sin(ang), jnp.cos(ang)], axis=-1).reshape(S, D)
    cos_pos = jnp.tile(pos[None, :, None, 1::2], (1, 1, 1, 2))
    sin_pos = jnp.tile(pos[None, :, None, 0::2], (1, 1, 1, 2))

    def rope(t):
        t2 = jnp.stack([-t[..., 1::2], t[..., 0::2]], axis=-1).reshape(t.shape)
        return t * cos_pos + t2 * sin_pos

    qw, kw = rope(qw), rope(kw)
    logits = jnp.einsum('bmhd,bnhd->bhmn', qw, kw)
    m = mask.astype(jnp.float32)
    mm = m[:, None, :, None]
    mn = m[:, None, None, :]
    logits = logits * mm + (-NEG) * (1.0 - mm)
    logits = logits * mn + (-NEG) * (1.0 - mn)
    tril = jnp.tril(jnp.ones((S, S), jnp.float32), k=-1)
    logits = logits - tril * NEG
    return logits / math.sqrt(D)


# ----------------------------------------------------------------------------
if __name__ == "__main__":
    B, S, H = 2, 8, 32           # batch, seq, hidden
    heads, head_size = 4, 16     # categories_size, head_size
    vocab, n_types = 100, 2
    D2 = 2 * head_size

    key = jax.random.PRNGKey(0)
    kids, kw, kb, kwe, kte, kpe = jax.random.split(key, 6)

    input_ids = jax.random.randint(kids, (B, S), 0, vocab)
    token_type_ids = jnp.zeros((B, S), jnp.int32)
    attention_mask = jnp.array([[1, 1, 1, 1, 1, 1, 1, 1],
                                [1, 1, 1, 1, 1, 0, 0, 0]], jnp.float32)

    # synthetic "BERT" embedding tables (deterministic)
    word_emb = 0.02 * jax.random.normal(kwe, (vocab, H), jnp.float32)
    type_emb = 0.02 * jax.random.normal(kte, (n_types, H), jnp.float32)
    pos_emb = 0.02 * jax.random.normal(kpe, (S, H), jnp.float32)

    # GlobalPointer linear: hidden -> heads * head_size * 2
    W = 0.05 * jax.random.normal(kw, (H, heads * D2), jnp.float32)
    b = 0.05 * jax.random.normal(kb, (heads * D2,), jnp.float32)

    Wq, Wk, bq, bk, cos_p, sin_p = prepare_global_pointer_params(
        W, b, S, heads, head_size)

    # "forward"
    hidden = synthetic_bert_encoder(input_ids, token_type_ids,
                                    word_emb, type_emb, pos_emb)

    run = jax.jit(functools.partial(global_pointer_pallas,
                                    heads=heads, head_size=head_size))
    logits = run(hidden, attention_mask, Wq, Wk, bq, bk, cos_p, sin_p)
    logits = jax.block_until_ready(logits)

    ref = torch_like_reference(hidden, attention_mask, W, b, heads, head_size)
    assert logits.shape == (B, heads, S, S)
    assert jnp.allclose(logits, ref, rtol=1e-4, atol=1e-2), (
        float(jnp.max(jnp.abs(logits - ref))))

    print("KERNEL_OK")
</pallas_src>

<mosaic_0001>
module attributes {stable_mosaic.version = 11 : i64} {
  func.func @_gp_head_kernel(%arg0: i32, %arg1: i32, %arg2: memref<1x8x32xbf16, #tpu.memory_space<vmem>>, %arg3: memref<1x8x1xf32, #tpu.memory_space<vmem>>, %arg4: memref<1x1x8xf32, #tpu.memory_space<vmem>>, %arg5: memref<1x32x16xbf16, #tpu.memory_space<vmem>>, %arg6: memref<1x32x16xbf16, #tpu.memory_space<vmem>>, %arg7: memref<1x1x16xf32, #tpu.memory_space<vmem>>, %arg8: memref<1x1x16xf32, #tpu.memory_space<vmem>>, %arg9: memref<8x16xf32, #tpu.memory_space<vmem>>, %arg10: memref<8x16xf32, #tpu.memory_space<vmem>>, %arg11: memref<1x1x8x8xf32, #tpu.memory_space<vmem>>, %arg12: memref<8x8xf32, #tpu.memory_space<vmem>>, %arg13: memref<8x8xf32, #tpu.memory_space<vmem>>) attributes {dimension_semantics = [#tpu.dimension_semantics<parallel>, #tpu.dimension_semantics<arbitrary>], iteration_bounds = array<i64: 2, 4>, scalar_prefetch = 0 : i64, scratch_operands = 2 : i64, tpu.core_type = #tpu.core_type<tc>, window_params = [{transform_indices = @transform_0, window_bounds = array<i64: 1, 8, 32>}, {transform_indices = @transform_1, window_bounds = array<i64: 1, 8, 1>}, {transform_indices = @transform_2, window_bounds = array<i64: 1, 1, 8>}, {transform_indices = @transform_3, window_bounds = array<i64: 1, 32, 16>}, {transform_indices = @transform_4, window_bounds = array<i64: 1, 32, 16>}, {transform_indices = @transform_5, window_bounds = array<i64: 1, 1, 16>}, {transform_indices = @transform_6, window_bounds = array<i64: 1, 1, 16>}, {pipeline_mode = #tpu.pipeline_mode<synchronous>, transform_indices = @transform_7, window_bounds = array<i64: 8, 16>}, {pipeline_mode = #tpu.pipeline_mode<synchronous>, transform_indices = @transform_8, window_bounds = array<i64: 8, 16>}, {transform_indices = @transform_9, window_bounds = array<i64: 1, 1, 8, 8>}]} {
    %c0_i32 = arith.constant 0 : i32
    %0 = arith.cmpi eq, %arg1, %c0_i32 : i32
    %1 = arith.extui %0 : i1 to i32
    %c0_i32_0 = arith.constant 0 : i32
    %2 = arith.cmpi ne, %1, %c0_i32_0 : i32
    scf.if %2 {
      %c0_30 = arith.constant 0 : index
      %c0_31 = arith.constant 0 : index
      %c0_32 = arith.constant 0 : index
      %39 = vector.load %arg3[%c0_30, %c0_31, %c0_32] : memref<1x8x1xf32, #tpu.memory_space<vmem>>, vector<1x8x1xf32>
      %40 = vector.shape_cast %39 : vector<1x8x1xf32> to vector<8x1xf32>
      %c0_33 = arith.constant 0 : index
      %c0_34 = arith.constant 0 : index
      %c0_35 = arith.constant 0 : index
      %41 = vector.load %arg4[%c0_33, %c0_34, %c0_35] : memref<1x1x8xf32, #tpu.memory_space<vmem>>, vector<1x1x8xf32>
      %42 = vector.shape_cast %41 : vector<1x1x8xf32> to vector<1x8xf32>
      %43 = vector.broadcast %40 : vector<8x1xf32> to vector<8x8xf32>
      %44 = vector.broadcast %42 : vector<1x8xf32> to vector<8x8xf32>
      %45 = arith.mulf %43, %44 : vector<8x8xf32>
      %46 = tpu.iota {dimensions = array<i32: 0>} : vector<8x8xi32>
      %47 = tpu.iota {dimensions = array<i32: 1>} : vector<8x8xi32>
      %48 = arith.cmpi sgt, %46, %47 : vector<8x8xi32>
      %49 = arith.extui %48 : vector<8x8xi1> to vector<8x8xi32>
      %50 = arith.sitofp %49 : vector<8x8xi32> to vector<8x8xf32>
      %c0_36 = arith.constant 0 : index
      %c0_37 = arith.constant 0 : index
      %51 = vector.load %arg12[%c0_36, %c0_37] : memref<8x8xf32, #tpu.memory_space<vmem>>, vector<8x8xf32>
      tpu.vector_store %arg12[%c0_36, %c0_37], %45 {strides = array<i32>} : memref<8x8xf32, #tpu.memory_space<vmem>>, vector<8x8xf32>,
      %cst_38 = arith.constant 1.000000e+00 : f32
      %52 = vector.broadcast %cst_38 : f32 to vector<8x8xf32>
      %53 = arith.subf %52, %45 : vector<8x8xf32>
      %54 = arith.addf %53, %50 : vector<8x8xf32>
      %cst_39 = arith.constant -2.500000e+11 : f32
      %55 = vector.broadcast %cst_39 : f32 to vector<8x8xf32>
      %56 = arith.mulf %55, %54 : vector<8x8xf32>
      %c0_40 = arith.constant 0 : index
      %c0_41 = arith.constant 0 : index
      %57 = vector.load %arg13[%c0_40, %c0_41] : memref<8x8xf32, #tpu.memory_space<vmem>>, vector<8x8xf32>
      tpu.vector_store %arg13[%c0_40, %c0_41], %56 {strides = array<i32>} : memref<8x8xf32, #tpu.memory_space<vmem>>, vector<8x8xf32>,
    } else {
    }
    %c0 = arith.constant 0 : index
    %c0_1 = arith.constant 0 : index
    %c0_2 = arith.constant 0 : index
    %3 = vector.load %arg2[%c0, %c0_1, %c0_2] : memref<1x8x32xbf16, #tpu.memory_space<vmem>>, vector<1x8x32xbf16>
    %4 = vector.shape_cast %3 : vector<1x8x32xbf16> to vector<8x32xbf16>
    %c0_3 = arith.constant 0 : index
    %c0_4 = arith.constant 0 : index
    %c0_5 = arith.constant 0 : index
    %5 = vector.load %arg5[%c0_3, %c0_4, %c0_5] : memref<1x32x16xbf16, #tpu.memory_space<vmem>>, vector<1x32x16xbf16>
    %6 = vector.shape_cast %5 : vector<1x32x16xbf16> to vector<32x16xbf16>
    %cst = arith.constant dense<0.000000e+00> : vector<8x16xf32>
    %7 = tpu.matmul %4, %6, %cst {dimension_numbers = #tpu.dot_dimension_numbers<[1], [0], [0], [1], [0, 0, 1, 1], [], []>} : vector<8x32xbf16>, vector<32x16xbf16>, vector<8x16xf32> -> vector<8x16xf32>
    %c0_6 = arith.constant 0 : index
    %c0_7 = arith.constant 0 : index
    %c0_8 = arith.constant 0 : index
    %8 = vector.load %arg7[%c0_6, %c0_7, %c0_8] : memref<1x1x16xf32, #tpu.memory_space<vmem>>, vector<1x1x16xf32>
    %9 = vector.shape_cast %8 : vector<1x1x16xf32> to vector<1x16xf32>
    %10 = vector.broadcast %9 : vector<1x16xf32> to vector<8x16xf32>
    %11 = arith.addf %7, %10 : vector<8x16xf32>
    %c0_9 = arith.constant 0 : index
    %c0_10 = arith.constant 0 : index
    %c0_11 = arith.constant 0 : index
    %12 = vector.load %arg6[%c0_9, %c0_10, %c0_11] : memref<1x32x16xbf16, #tpu.memory_space<vmem>>, vector<1x32x16xbf16>
    %13 = vector.shape_cast %12 : vector<1x32x16xbf16> to vector<32x16xbf16>
    %cst_12 = arith.constant dense<0.000000e+00> : vector<8x16xf32>
    %14 = tpu.matmul %4, %13, %cst_12 {dimension_numbers = #tpu.dot_dimension_numbers<[1], [0], [0], [1], [0, 0, 1, 1], [], []>} : vector<8x32xbf16>, vector<32x16xbf16>, vector<8x16xf32> -> vector<8x16xf32>
    %c0_13 = arith.constant 0 : index
    %c0_14 = arith.constant 0 : index
    %c0_15 = arith.constant 0 : index
    %15 = vector.load %arg8[%c0_13, %c0_14, %c0_15] : memref<1x1x16xf32, #tpu.memory_space<vmem>>, vector<1x1x16xf32>
    %16 = vector.shape_cast %15 : vector<1x1x16xf32> to vector<1x16xf32>
    %17 = vector.broadcast %16 : vector<1x16xf32> to vector<8x16xf32>
    %18 = arith.addf %14, %17 : vector<8x16xf32>
    %c0_16 = arith.constant 0 : index
    %c0_17 = arith.constant 0 : index
    %19 = vector.load %arg9[%c0_16, %c0_17] : memref<8x16xf32, #tpu.memory_space<vmem>>, vector<8x16xf32>
    %c0_18 = arith.constant 0 : index
    %c0_19 = arith.constant 0 : index
    %20 = vector.load %arg10[%c0_18, %c0_19] : memref<8x16xf32, #tpu.memory_space<vmem>>, vector<8x16xf32>
    %21 = arith.mulf %11, %19 : vector<8x16xf32>
    %c8_i32 = arith.constant 8 : i32
    %22 = tpu.dynamic_rotate %11 by %c8_i32 dim 1 : vector<8x16xf32>, i32 -> vector<8x16xf32>
    %23 = arith.mulf %22, %20 : vector<8x16xf32>
    %24 = arith.addf %21, %23 : vector<8x16xf32>
    %25 = arith.mulf %18, %19 : vector<8x16xf32>
    %c8_i32_20 = arith.constant 8 : i32
    %26 = tpu.dynamic_rotate %18 by %c8_i32_20 dim 1 : vector<8x16xf32>, i32 -> vector<8x16xf32>
    %27 = arith.mulf %26, %20 : vector<8x16xf32>
    %28 = arith.addf %25, %27 : vector<8x16xf32>
    %29 = arith.truncf %24 : vector<8x16xf32> to vector<8x16xbf16>
    %30 = arith.truncf %28 : vector<8x16xf32> to vector<8x16xbf16>
    %cst_21 = arith.constant dense<0.000000e+00> : vector<8x8xf32>
    %31 = tpu.matmul %29, %30, %cst_21 {dimension_numbers = #tpu.dot_dimension_numbers<[1], [1], [0], [0], [0, 0, 1, 0], [], []>} : vector<8x16xbf16>, vector<8x16xbf16>, vector<8x8xf32> -> vector<8x8xf32>
    %c0_22 = arith.constant 0 : index
    %c0_23 = arith.constant 0 : index
    %32 = vector.load %arg12[%c0_22, %c0_23] : memref<8x8xf32, #tpu.memory_space<vmem>>, vector<8x8xf32>
    %33 = arith.mulf %31, %32 : vector<8x8xf32>
    %c0_24 = arith.constant 0 : index
    %c0_25 = arith.constant 0 : index
    %34 = vector.load %arg13[%c0_24, %c0_25] : memref<8x8xf32, #tpu.memory_space<vmem>>, vector<8x8xf32>
    %35 = arith.addf %33, %34 : vector<8x8xf32>
    %c0_26 = arith.constant 0 : index
    %c0_27 = arith.constant 0 : index
    %c0_28 = arith.constant 0 : index
    %c0_29 = arith.constant 0 : index
    %36 = vector.load %arg11[%c0_26, %c0_27, %c0_28, %c0_29] : memref<1x1x8x8xf32, #tpu.memory_space<vmem>>, vector<1x1x8x8xf32>
    %37 = vector.shape_cast %36 : vector<1x1x8x8xf32> to vector<8x8xf32>
    %38 = vector.shape_cast %35 : vector<8x8xf32> to vector<1x1x8x8xf32>
    tpu.vector_store %arg11[%c0_26, %c0_27, %c0_28, %c0_29], %38 {strides = array<i32>} : memref<1x1x8x8xf32, #tpu.memory_space<vmem>>, vector<1x1x8x8xf32>,
    return
  }
  func.func @transform_0(%arg0: i32, %arg1: i32) -> (i32, i32, i32) {
    %c0_i32 = arith.constant 0 : i32
    %c0_i32_0 = arith.constant 0 : i32
    %c0_i32_1 = arith.constant 0 : i32
    return %arg0, %c0_i32, %c0_i32_0 : i32, i32, i32
  }
  func.func @transform_1(%arg0: i32, %arg1: i32) -> (i32, i32, i32) {
    %c0_i32 = arith.constant 0 : i32
    %c0_i32_0 = arith.constant 0 : i32
    %c0_i32_1 = arith.constant 0 : i32
    return %arg0, %c0_i32, %c0_i32_0 : i32, i32, i32
  }
  func.func @transform_2(%arg0: i32, %arg1: i32) -> (i32, i32, i32) {
    %c0_i32 = arith.constant 0 : i32
    %c0_i32_0 = arith.constant 0 : i32
    %c0_i32_1 = arith.constant 0 : i32
    return %arg0, %c0_i32, %c0_i32_0 : i32, i32, i32
  }
  func.func @transform_3(%arg0: i32, %arg1: i32) -> (i32, i32, i32) {
    %c0_i32 = arith.constant 0 : i32
    %c0_i32_0 = arith.constant 0 : i32
    %c0_i32_1 = arith.constant 0 : i32
    return %arg1, %c0_i32, %c0_i32_0 : i32, i32, i32
  }
  func.func @transform_4(%arg0: i32, %arg1: i32) -> (i32, i32, i32) {
    %c0_i32 = arith.constant 0 : i32
    %c0_i32_0 = arith.constant 0 : i32
    %c0_i32_1 = arith.constant 0 : i32
    return %arg1, %c0_i32, %c0_i32_0 : i32, i32, i32
  }
  func.func @transform_5(%arg0: i32, %arg1: i32) -> (i32, i32, i32) {
    %c0_i32 = arith.constant 0 : i32
    %c0_i32_0 = arith.constant 0 : i32
    %c0_i32_1 = arith.constant 0 : i32
    return %arg1, %c0_i32, %c0_i32_0 : i32, i32, i32
  }
  func.func @transform_6(%arg0: i32, %arg1: i32) -> (i32, i32, i32) {
    %c0_i32 = arith.constant 0 : i32
    %c0_i32_0 = arith.constant 0 : i32
    %c0_i32_1 = arith.constant 0 : i32
    return %arg1, %c0_i32, %c0_i32_0 : i32, i32, i32
  }
  func.func @transform_7(%arg0: i32, %arg1: i32) -> (i32, i32) {
    %c0_i32 = arith.constant 0 : i32
    %c0_i32_0 = arith.constant 0 : i32
    %c0_i32_1 = arith.constant 0 : i32
    return %c0_i32, %c0_i32_0 : i32, i32
  }
  func.func @transform_8(%arg0: i32, %arg1: i32) -> (i32, i32) {
    %c0_i32 = arith.constant 0 : i32
    %c0_i32_0 = arith.constant 0 : i32
    %c0_i32_1 = arith.constant 0 : i32
    return %c0_i32, %c0_i32_0 : i32, i32
  }
  func.func @transform_9(%arg0: i32, %arg1: i32) -> (i32, i32, i32, i32) {
    %c0_i32 = arith.constant 0 : i32
    %c0_i32_0 = arith.constant 0 : i32
    %c0_i32_1 = arith.constant 0 : i32
    return %arg0, %arg1, %c0_i32, %c0_i32_0 : i32, i32, i32, i32
  }
}

</mosaic_0001>

<llo_original>
// kernel: global_pointer_pallas.1
$region0: #{global_pointer_pallas.1}
  #allocation0 [shape = 'u32[]', space=smem, size = 0x4, offset = 0x4, fixed_abs, tag = 'smem constant byte address 0x4 - core index']
  #allocation1 [shape = 'u32[144,128]{1,0:T(1,128)}', space=vmem, size = 0x12000, scoped, tag = 'internal scratch']
  #allocation2 [shape = 'f32[8,8]{1,0:T(8,128)}', space=vmem, size = 0x1000, scoped, tag = 'scratch operand']
  #allocation3 [shape = 'f32[8,8]{1,0:T(8,128)}', space=vmem, size = 0x1000, scoped, tag = 'scratch operand']
  %s0 = inlined_call_operand.vmem [shape: bf16[2,8,32], index: 0, kind: input, shape index: {}]
  %s1 = inlined_call_operand.vmem [shape: f32[2,8,1], index: 1, kind: input, shape index: {}]
  %s2 = inlined_call_operand.vmem [shape: f32[2,1,8], index: 2, kind: input, shape index: {}]
  %s3 = inlined_call_operand.vmem [shape: bf16[4,32,16], index: 3, kind: input, shape index: {}]
  %s4 = inlined_call_operand.vmem [shape: bf16[4,32,16], index: 4, kind: input, shape index: {}]
  %s5 = inlined_call_operand.vmem [shape: f32[4,1,16], index: 5, kind: input, shape index: {}]
  %s6 = inlined_call_operand.vmem [shape: f32[4,1,16], index: 6, kind: input, shape index: {}]
  %s7 = inlined_call_operand.vmem [shape: f32[8,16], index: 7, kind: input, shape index: {}]
  %s8 = inlined_call_operand.vmem [shape: f32[8,16], index: 8, kind: input, shape index: {}]
  %s9 = inlined_call_operand.hbm [shape: f32[2,4,8,8], index: 9, kind: output, shape index: {}]
  %s10 = sld [smem:[#allocation0]]
  $region73: #{global_pointer_pallas.1} parent=0
    _
  %s12 = ssub.s32 1, %s10
  %s13 = scalar_select 0, %s12, %s10
  $region1: #{global_pointer_pallas.1} parent=0
    #allocation4 [shape = 'u8[8192]{0}', space=vmem, size = 0x2000, scoped, tag = 'output window, operand 0']
    #allocation5 [shape = 's32[2]{0}', space=sflag, size = 0x8, scoped, tag = 'scoped memory for global_pointer_pallas.1']
    %14 = vsyncpa [#allocation5], 0
    %s15 = scalar_lea.sflag [#allocation5], 1
    %16 = vsyncpa %s15, 0
    loop: start=0, step=1, limit=10
    $region2: #{global_pointer_pallas.1} parent=1 // loop_pre_header
      _
    $region3: #{global_pointer_pallas.1} parent=1 // loop_header
      %s18 = sphi 0, %s22
      %p19 = scmp.ge.s32.totalorder %s18, 10
      %s25 = sphi 0, %s37
      %s26 = sphi 0, %s33
      %s27 = sphi 0, %s25
      %s28 = sphi 0, %s26
      %s29 = sphi 0, %s27
      %s30 = sphi 0, %s28
      %s40 = sphi 0, %s42
      %s43 = sphi 0, %s40
      %s44 = sphi 0, %s43
      %s60 = sphi 0, %s44
      %s66 = sphi 0, %s68
      %s69 = sphi 0, %s66
      %s70 = sphi 0, %s69
      %s86 = sphi 0, %s70
      %s92 = sphi 0, %s94
      %s95 = sphi 0, %s92
      %s96 = sphi 0, %s95
      %s112 = sphi 0, %s96
      %s118 = sphi 0, %s120
      %s121 = sphi 0, %s118
      %s122 = sphi 0, %s121
      %s138 = sphi 0, %s122
      %s144 = sphi 0, %s146
      %s147 = sphi 0, %s144
      %s148 = sphi 0, %s147
      %s164 = sphi 0, %s148
      %s170 = sphi 0, %s172
      %s173 = sphi 0, %s170
      %s174 = sphi 0, %s173
      %s190 = sphi 0, %s174
      %s196 = sphi 0, %s198
      %s199 = sphi 0, %s196
      %s200 = sphi 0, %s199
      %s216 = sphi 0, %s200
      %s220 = sphi 0, %s220
      %s222 = sphi 0, %s220
      %s223 = sphi 0, %s222
      %s237 = sphi 0, %s223
      %s241 = sphi 0, %s241
      %s243 = sphi 0, %s241
      %s244 = sphi 0, %s243
      %s258 = sphi 0, %s244
      %s266 = sphi 0, %s268
      %s269 = sphi 0, %s266
      %s270 = sphi 0, %s269
      %s286 = sphi 0, %s270
    $region4: #{global_pointer_pallas.1} parent=1 // loop_header_branch
      %21 = sbr.rel (%p19) target = $region8
    $region5: #{global_pointer_pallas.1} parent=1 // loop_body
      %s23 = ssub.s32 %s18, 1
      %s24 = ssub.s32 %s18, 2
      %s31 = sadd.s32 1, %s26
      %p32 = scmp.ge.s32.totalorder %s31, 4
      %s33 = scalar_select %p32, 0, %s31
      %s34 = sadd.s32 1, %s25
      %s35 = scalar_select %p32, %s34, %s25
      %p36 = scmp.ge.s32.totalorder %s35, 2
      %s37 = scalar_select %p36, 0, %s35
      %s38 = ssub.s32 %s25, %s37
      %p39 = scmp.eq.s32.totalorder %s38, 0
      %s41 = sadd.s32 %s40, 1
      %s42 = scalar_select %p39, %s40, %s41
      %p45 = pneg %p39
      %p46 = scmp.eq.s32.totalorder %s18, 7
      %p47 = por %p45, %p46
      %p48 = scmp.ne.s32.totalorder %s40, %s43
      %p49 = scmp.eq.s32.totalorder %s18, 0
      %p50 = por %p48, %p49
      %p51 = scmp.ne.s32.totalorder %s40, %s43
      %p52 = scmp.eq.s32.totalorder %s23, 7
      %p53 = por %p51, %p52
      %p54 = scmp.ne.s32.totalorder %s43, %s44
      %p55 = scmp.eq.s32.totalorder %s23, 0
      %p56 = por %p54, %p55
      %p57 = scmp.ne.s32.totalorder %s43, %s44
      %p58 = scmp.eq.s32.totalorder %s24, 7
      %p59 = por %p57, %p58
      %p61 = scmp.ne.s32.totalorder %s44, %s60
      %p62 = scmp.eq.s32.totalorder %s24, 0
      %p63 = por %p61, %p62
      %s64 = ssub.s32 %s25, %s37
      %p65 = scmp.eq.s32.totalorder %s64, 0
      %s67 = sadd.s32 %s66, 1
      %s68 = scalar_select %p65, %s66, %s67
      %p71 = pneg %p65
      %p72 = scmp.eq.s32.totalorder %s18, 7
      %p73 = por %p71, %p72
      %p74 = scmp.ne.s32.totalorder %s66, %s69
      %p75 = scmp.eq.s32.totalorder %s18, 0
      %p76 = por %p74, %p75
      %p77 = scmp.ne.s32.totalorder %s66, %s69
      %p78 = scmp.eq.s32.totalorder %s23, 7
      %p79 = por %p77, %p78
      %p80 = scmp.ne.s32.totalorder %s69, %s70
      %p81 = scmp.eq.s32.totalorder %s23, 0
      %p82 = por %p80, %p81
      %p83 = scmp.ne.s32.totalorder %s69, %s70
      %p84 = scmp.eq.s32.totalorder %s24, 7
      %p85 = por %p83, %p84
      %p87 = scmp.ne.s32.totalorder %s70, %s86
      %p88 = scmp.eq.s32.totalorder %s24, 0
      %p89 = por %p87, %p88
      %s90 = ssub.s32 %s25, %s37
      %p91 = scmp.eq.s32.totalorder %s90, 0
      %s93 = sadd.s32 %s92, 1
      %s94 = scalar_select %p91, %s92, %s93
      %p97 = pneg %p91
      %p98 = scmp.eq.s32.totalorder %s18, 7
      %p99 = por %p97, %p98
      %p100 = scmp.ne.s32.totalorder %s92, %s95
      %p101 = scmp.eq.s32.totalorder %s18, 0
      %p102 = por %p100, %p101
      %p103 = scmp.ne.s32.totalorder %s92, %s95
      %p104 = scmp.eq.s32.totalorder %s23, 7
      %p105 = por %p103, %p104
      %p106 = scmp.ne.s32.totalorder %s95, %s96
      %p107 = scmp.eq.s32.totalorder %s23, 0
      %p108 = por %p106, %p107
      %p109 = scmp.ne.s32.totalorder %s95, %s96
      %p110 = scmp.eq.s32.totalorder %s24, 7
      %p111 = por %p109, %p110
      %p113 = scmp.ne.s32.totalorder %s96, %s112
      %p114 = scmp.eq.s32.totalorder %s24, 0
      %p115 = por %p113, %p114
      %s116 = ssub.s32 %s26, %s33
      %p117 = scmp.eq.s32.totalorder %s116, 0
      %s119 = sadd.s32 %s118, 1
      %s120 = scalar_select %p117, %s118, %s119
      %p123 = pneg %p117
      %p124 = scmp.eq.s32.totalorder %s18, 7
      %p125 = por %p123, %p124
      %p126 = scmp.ne.s32.totalorder %s118, %s121
      %p127 = scmp.eq.s32.totalorder %s18, 0
      %p128 = por %p126, %p127
      %p129 = scmp.ne.s32.totalorder %s118, %s121
      %p130 = scmp.eq.s32.totalorder %s23, 7
      %p131 = por %p129, %p130
      %p132 = scmp.ne.s32.totalorder %s121, %s122
      %p133 = scmp.eq.s32.totalorder %s23, 0
      %p134 = por %p132, %p133
      %p135 = scmp.ne.s32.totalorder %s121, %s122
      %p136 = scmp.eq.s32.totalorder %s24, 7
      %p137 = por %p135, %p136
      %p139 = scmp.ne.s32.totalorder %s122, %s138
      %p140 = scmp.eq.s32.totalorder %s24, 0
      %p141 = por %p139, %p140
      %s142 = ssub.s32 %s26, %s33
      %p143 = scmp.eq.s32.totalorder %s142, 0
      %s145 = sadd.s32 %s144, 1
      %s146 = scalar_select %p143, %s144, %s145
      %p149 = pneg %p143
      %p150 = scmp.eq.s32.totalorder %s18, 7
      %p151 = por %p149, %p150
      %p152 = scmp.ne.s32.totalorder %s144, %s147
      %p153 = scmp.eq.s32.totalorder %s18, 0
      %p154 = por %p152, %p153
      %p155 = scmp.ne.s32.totalorder %s144, %s147
      %p156 = scmp.eq.s32.totalorder %s23, 7
      %p157 = por %p155, %p156
      %p158 = scmp.ne.s32.totalorder %s147, %s148
      %p159 = scmp.eq.s32.totalorder %s23, 0
      %p160 = por %p158, %p159
      %p161 = scmp.ne.s32.totalorder %s147, %s148
      %p162 = scmp.eq.s32.totalorder %s24, 7
      %p163 = por %p161, %p162
      %p165 = scmp.ne.s32.totalorder %s148, %s164
      %p166 = scmp.eq.s32.totalorder %s24, 0
      %p167 = por %p165, %p166
      %s168 = ssub.s32 %s26, %s33
      %p169 = scmp.eq.s32.totalorder %s168, 0
      %s171 = sadd.s32 %s170, 1
      %s172 = scalar_select %p169, %s170, %s171
      %p175 = pneg %p169
      %p176 = scmp.eq.s32.totalorder %s18, 7
      %p177 = por %p175, %p176
      %p178 = scmp.ne.s32.totalorder %s170, %s173
      %p179 = scmp.eq.s32.totalorder %s18, 0
      %p180 = por %p178, %p179
      %p181 = scmp.ne.s32.totalorder %s170, %s173
      %p182 = scmp.eq.s32.totalorder %s23, 7
      %p183 = por %p181, %p182
      %p184 = scmp.ne.s32.totalorder %s173, %s174
      %p185 = scmp.eq.s32.totalorder %s23, 0
      %p186 = por %p184, %p185
      %p187 = scmp.ne.s32.totalorder %s173, %s174
      %p188 = scmp.eq.s32.totalorder %s24, 7
      %p189 = por %p187, %p188
      %p191 = scmp.ne.s32.totalorder %s174, %s190
      %p192 = scmp.eq.s32.totalorder %s24, 0
      %p193 = por %p191, %p192
      %s194 = ssub.s32 %s26, %s33
      %p195 = scmp.eq.s32.totalorder %s194, 0
      %s197 = sadd.s32 %s196, 1
      %s198 = scalar_select %p195, %s196, %s197
      %p201 = pneg %p195
      %p202 = scmp.eq.s32.totalorder %s18, 7
      %p203 = por %p201, %p202
      %p204 = scmp.ne.s32.totalorder %s196, %s199
      %p205 = scmp.eq.s32.totalorder %s18, 0
      %p206 = por %p204, %p205
      %p207 = scmp.ne.s32.totalorder %s196, %s199
      %p208 = scmp.eq.s32.totalorder %s23, 7
      %p209 = por %p207, %p208
      %p210 = scmp.ne.s32.totalorder %s199, %s200
      %p211 = scmp.eq.s32.totalorder %s23, 0
      %p212 = por %p210, %p211
      %p213 = scmp.ne.s32.totalorder %s199, %s200
      %p214 = scmp.eq.s32.totalorder %s24, 7
      %p215 = por %p213, %p214
      %p217 = scmp.ne.s32.totalorder %s200, %s216
      %p218 = scmp.eq.s32.totalorder %s24, 0
      %p219 = por %p217, %p218
      %s221 = sadd.s32 %s220, 1
      %p224 = scmp.eq.s32.totalorder %s18, 7
      %p225 = scmp.ne.s32.totalorder %s220, %s222
      %p226 = scmp.eq.s32.totalorder %s18, 0
      %p227 = por %p225, %p226
      %p228 = scmp.ne.s32.totalorder %s220, %s222
      %p229 = scmp.eq.s32.totalorder %s23, 7
      %p230 = por %p228, %p229
      %p231 = scmp.ne.s32.totalorder %s222, %s223
      %p232 = scmp.eq.s32.totalorder %s23, 0
      %p233 = por %p231, %p232
      %p234 = scmp.ne.s32.totalorder %s222, %s223
      %p235 = scmp.eq.s32.totalorder %s24, 7
      %p236 = por %p234, %p235
      %p238 = scmp.ne.s32.totalorder %s223, %s237
      %p239 = scmp.eq.s32.totalorder %s24, 0
      %p240 = por %p238, %p239
      %s242 = sadd.s32 %s241, 1
      %p245 = scmp.eq.s32.totalorder %s18, 7
      %p246 = scmp.ne.s32.totalorder %s241, %s243
      %p247 = scmp.eq.s32.totalorder %s18, 0
      %p248 = por %p246, %p247
      %p249 = scmp.ne.s32.totalorder %s241, %s243
      %p250 = scmp.eq.s32.totalorder %s23, 7
      %p251 = por %p249, %p250
      %p252 = scmp.ne.s32.totalorder %s243, %s244
      %p253 = scmp.eq.s32.totalorder %s23, 0
      %p254 = por %p252, %p253
      %p255 = scmp.ne.s32.totalorder %s243, %s244
      %p256 = scmp.eq.s32.totalorder %s24, 7
      %p257 = por %p255, %p256
      %p259 = scmp.ne.s32.totalorder %s244, %s258
      %p260 = scmp.eq.s32.totalorder %s24, 0
      %p261 = por %p259, %p260
      %s262 = ssub.s32 %s25, %s37
      %s263 = ssub.s32 %s26, %s33
      %s264 = sor.u32 %s262, %s263
      %p265 = scmp.eq.s32.totalorder %s264, 0
      %s267 = sadd.s32 %s266, 1
      %s268 = scalar_select %p265, %s266, %s267
      %p271 = pneg %p265
      %p272 = scmp.eq.s32.totalorder %s18, 7
      %p273 = por %p271, %p272
      %p274 = scmp.ne.s32.totalorder %s266, %s269
      %p275 = scmp.eq.s32.totalorder %s18, 0
      %p276 = por %p274, %p275
      %p277 = scmp.ne.s32.totalorder %s266, %s269
      %p278 = scmp.eq.s32.totalorder %s23, 7
      %p279 = por %p277, %p278
      %p280 = scmp.ne.s32.totalorder %s269, %s270
      %p281 = scmp.eq.s32.totalorder %s23, 0
      %p282 = por %p280, %p281
      %p283 = scmp.ne.s32.totalorder %s269, %s270
      %p284 = scmp.eq.s32.totalorder %s24, 7
      %p285 = por %p283, %p284
      %p287 = scmp.ne.s32.totalorder %s270, %s286
      %p288 = scmp.eq.s32.totalorder %s24, 0
      %p289 = por %p287, %p288
      %p290 = scmp.le.s32.totalorder 1, %s18
      %p291 = scmp.lt.s32.totalorder %s18, 9
      %p292 = pnand %p290, %p291
      %p293 = pneg %p292
      // Predicated region
      $region9: #{global_pointer_pallas.1} parent=5 // pred_check
        _
      $region10: #{global_pointer_pallas.1} parent=5 // pred_check_branch
        %295 = sbr.rel (%p292) target = $region12
      $region11: #{global_pointer_pallas.1} parent=5 // pred_region
        %s296 = ssub.s32 %s18, 1
        // Predicated region
        $region13: #{global_pointer_pallas.1} parent=11 // pred_check
          %p297 = pneg %p233
        $region14: #{global_pointer_pallas.1} parent=11 // pred_check_branch
          %299 = sbr.rel (%p297) target = $region16
        $region15: #{global_pointer_pallas.1} parent=11 // pred_region
          _
        $region16: #{global_pointer_pallas.1} parent=11 // pred_fallthru
          _
        // Predicated region
        $region17: #{global_pointer_pallas.1} parent=11 // pred_check
          %p300 = pneg %p254
        $region18: #{global_pointer_pallas.1} parent=11 // pred_check_branch
          %302 = sbr.rel (%p300) target = $region20
        $region19: #{global_pointer_pallas.1} parent=11 // pred_region
          _
        $region20: #{global_pointer_pallas.1} parent=11 // pred_fallthru
          _
      $region12: #{global_pointer_pallas.1} parent=5 // pred_fallthru
        _
      %p303 = scmp.lt.s32.totalorder %s18, 8
      // Predicated region
      $region21: #{global_pointer_pallas.1} parent=5 // pred_check
        %p304 = pneg %p303
      $region22: #{global_pointer_pallas.1} parent=5 // pred_check_branch
        %306 = sbr.rel (%p304) target = $region24
      $region23: #{global_pointer_pallas.1} parent=5 // pred_region
        // Predicated region
        $region25: #{global_pointer_pallas.1} parent=23 // pred_check
          %p307 = pneg %p50
        $region26: #{global_pointer_pallas.1} parent=23 // pred_check_branch
          %309 = sbr.rel (%p307) target = $region28
        $region27: #{global_pointer_pallas.1} parent=23 // pred_region
          %p310 = scmp.lt.s32.totalorder %s25, 1
          %s311 = scalar_select %p310, %s25, 1
          %s312 = smul.addr %s311, 4
          %s313 = scalar_lea.vmem %s0, %s312
        $region28: #{global_pointer_pallas.1} parent=23 // pred_fallthru
          _
        // Predicated region
        $region29: #{global_pointer_pallas.1} parent=23 // pred_check
          %p314 = pneg %p76
        $region30: #{global_pointer_pallas.1} parent=23 // pred_check_branch
          %316 = sbr.rel (%p314) target = $region32
        $region31: #{global_pointer_pallas.1} parent=23 // pred_region
          %p317 = scmp.lt.s32.totalorder %s25, 1
          %s318 = scalar_select %p317, %s25, 1
          %s319 = smul.addr %s318, 8
          %s320 = scalar_lea.vmem %s1, %s319
        $region32: #{global_pointer_pallas.1} parent=23 // pred_fallthru
          _
        // Predicated region
        $region33: #{global_pointer_pallas.1} parent=23 // pred_check
          %p321 = pneg %p102
        $region34: #{global_pointer_pallas.1} parent=23 // pred_check_branch
          %323 = sbr.rel (%p321) target = $region36
        $region35: #{global_pointer_pallas.1} parent=23 // pred_region
          %p324 = scmp.lt.s32.totalorder %s25, 1
          %s325 = scalar_select %p324, %s25, 1
          %s326 = scalar_lea.vmem %s2, %s325
        $region36: #{global_pointer_pallas.1} parent=23 // pred_fallthru
          _
        // Predicated region
        $region37: #{global_pointer_pallas.1} parent=23 // pred_check
          %p327 = pneg %p128
        $region38: #{global_pointer_pallas.1} parent=23 // pred_check_branch
          %329 = sbr.rel (%p327) target = $region40
        $region39: #{global_pointer_pallas.1} parent=23 // pred_region
          %p330 = scmp.lt.s32.totalorder %s26, 3
          %s331 = scalar_select %p330, %s26, 3
          %s332 = smul.addr %s331, 4
          %s333 = smul.addr %s332, 4
          %s334 = scalar_lea.vmem %s3, %s333
        $region40: #{global_pointer_pallas.1} parent=23 // pred_fallthru
          _
        // Predicated region
        $region41: #{global_pointer_pallas.1} parent=23 // pred_check
          %p335 = pneg %p154
        $region42: #{global_pointer_pallas.1} parent=23 // pred_check_branch
          %337 = sbr.rel (%p335) target = $region44
        $region43: #{global_pointer_pallas.1} parent=23 // pred_region
          %p338 = scmp.lt.s32.totalorder %s26, 3
          %s339 = scalar_select %p338, %s26, 3
          %s340 = smul.addr %s339, 4
          %s341 = smul.addr %s340, 4
          %s342 = scalar_lea.vmem %s4, %s341
        $region44: #{global_pointer_pallas.1} parent=23 // pred_fallthru
          _
        // Predicated region
        $region45: #{global_pointer_pallas.1} parent=23 // pred_check
          %p343 = pneg %p180
        $region46: #{global_pointer_pallas.1} parent=23 // pred_check_branch
          %345 = sbr.rel (%p343) target = $region48
        $region47: #{global_pointer_pallas.1} parent=23 // pred_region
          %p346 = scmp.lt.s32.totalorder %s26, 3
          %s347 = scalar_select %p346, %s26, 3
          %s348 = scalar_lea.vmem %s5, %s347
        $region48: #{global_pointer_pallas.1} parent=23 // pred_fallthru
          _
        // Predicated region
        $region49: #{global_pointer_pallas.1} parent=23 // pred_check
          %p349 = pneg %p206
        $region50: #{global_pointer_pallas.1} parent=23 // pred_check_branch
          %351 = sbr.rel (%p349) target = $region52
        $region51: #{global_pointer_pallas.1} parent=23 // pred_region
          %p352 = scmp.lt.s32.totalorder %s26, 3
          %s353 = scalar_select %p352, %s26, 3
          %s354 = scalar_lea.vmem %s6, %s353
        $region52: #{global_pointer_pallas.1} parent=23 // pred_fallthru
          _
      $region24: #{global_pointer_pallas.1} parent=5 // pred_fallthru
        _
      %p355 = scmp.le.s32.totalorder 1, %s18
      %p356 = scmp.lt.s32.totalorder %s18, 9
      %p357 = pnand %p355, %p356
      %p358 = pneg %p357
      // Predicated region
      $region53: #{global_pointer_pallas.1} parent=5 // pred_check
        _
      $region54: #{global_pointer_pallas.1} parent=5 // pred_check_branch
        %360 = sbr.rel (%p357) target = $region56
      $region55: #{global_pointer_pallas.1} parent=5 // pred_region
        %s361 = ssub.s32 %s18, 1
        %p362 = scmp.lt.s32.totalorder %s27, 1
        %s363 = scalar_select %p362, %s27, 1
        %s364 = smul.addr %s363, 4
        %s365 = scalar_lea.vmem %s0, %s364
        %p366 = pneg %p56
        %p367 = pneg %p53
        %p368 = scmp.lt.s32.totalorder %s27, 1
        %s369 = scalar_select %p368, %s27, 1
        %s370 = smul.addr %s369, 8
        %s371 = scalar_lea.vmem %s1, %s370
        %p372 = pneg %p82
        %p373 = pneg %p79
        %p374 = scmp.lt.s32.totalorder %s27, 1
        %s375 = scalar_select %p374, %s27, 1
        %s376 = scalar_lea.vmem %s2, %s375
        %p377 = pneg %p108
        %p378 = pneg %p105
        %p379 = scmp.lt.s32.totalorder %s28, 3
        %s380 = scalar_select %p379, %s28, 3
        %s381 = smul.addr %s380, 4
        %s382 = smul.addr %s381, 4
        %s383 = scalar_lea.vmem %s3, %s382
        %p384 = pneg %p134
        %p385 = pneg %p131
        %p386 = scmp.lt.s32.totalorder %s28, 3
        %s387 = scalar_select %p386, %s28, 3
        %s388 = smul.addr %s387, 4
        %s389 = smul.addr %s388, 4
        %s390 = scalar_lea.vmem %s4, %s389
        %p391 = pneg %p160
        %p392 = pneg %p157
        %p393 = scmp.lt.s32.totalorder %s28, 3
        %s394 = scalar_select %p393, %s28, 3
        %s395 = scalar_lea.vmem %s5, %s394
        %p396 = pneg %p186
        %p397 = pneg %p183
        %p398 = scmp.lt.s32.totalorder %s28, 3
        %s399 = scalar_select %p398, %s28, 3
        %s400 = scalar_lea.vmem %s6, %s399
        %p401 = pneg %p212
        %p402 = pneg %p209
        %p403 = pneg %p233
        %p404 = pneg %p230
        %p405 = pneg %p254
        %p406 = pneg %p251
        %p407 = pneg %p282
        %p408 = pneg %p279
        %s409 = sand.u32 %s269, 1
        %s410 = scalar_lea.sflag [#allocation5], %s409
        %s411 = sand.u32 %s269, 1
        %s412 = smul.addr %s411, 8
        %s413 = scalar_lea.vmem [#allocation4], %s412
        %p414 = scmp.lt.s32.totalorder %s27, 1
        %s415 = scalar_select %p414, %s27, 1
        %s416 = smul.addr %s415, 4
        %s417 = scalar_lea.vmem %s0, %s416
        %p418 = scmp.lt.s32.totalorder %s27, 1
        %s419 = scalar_select %p418, %s27, 1
        %s420 = smul.addr %s419, 8
        %s421 = scalar_lea.vmem %s1, %s420
        %p422 = scmp.lt.s32.totalorder %s27, 1
        %s423 = scalar_select %p422, %s27, 1
        %s424 = scalar_lea.vmem %s2, %s423
        %p425 = scmp.lt.s32.totalorder %s28, 3
        %s426 = scalar_select %p425, %s28, 3
        %s427 = smul.addr %s426, 4
        %s428 = smul.addr %s427, 4
        %s429 = scalar_lea.vmem %s3, %s428
        %p430 = scmp.lt.s32.totalorder %s28, 3
        %s431 = scalar_select %p430, %s28, 3
        %s432 = smul.addr %s431, 4
        %s433 = smul.addr %s432, 4
        %s434 = scalar_lea.vmem %s4, %s433
        %p435 = scmp.lt.s32.totalorder %s28, 3
        %s436 = scalar_select %p435, %s28, 3
        %s437 = scalar_lea.vmem %s5, %s436
        %p438 = scmp.lt.s32.totalorder %s28, 3
        %s439 = scalar_select %p438, %s28, 3
        %s440 = scalar_lea.vmem %s6, %s439
        %p442 = scmp.eq.s32.totalorder %s28, 0
        // Predicated region
        $region57: #{global_pointer_pallas.1} parent=55 // pred_check
          %p443 = pneg %p442
        $region58: #{global_pointer_pallas.1} parent=55 // pred_check_branch
          %445 = sbr.rel (%p443) target = $region60
        $region59: #{global_pointer_pallas.1} parent=55 // pred_region
          %v446 = vld [vmem:[%s421] sm:$0xff]
          %v447 = vld [vmem:[%s424] sm:$0x1]
          %449 = vset.pattern.permute.xlu0 0
          %450 = vperm.xlu0 %449, %v446
          %v451 = vpop.permute.xlu0 %450
          %v454 = vlaneseq
          %v455 = vshrl.u32 %v454, 7
          %v456 = vsub.s32 0, %v455
          %v457 = vrot.slane %v447, %v456
          %v459 = vmul.f32 %v451, %v457
          %v460 = vlaneseq
          %v461 = vshrl.u32 %v460, 7
          %v462 = vlaneseq
          %v463 = vand.u32 %v462, 127
          %vm464 = vcmp.gt.s32.totalorder %v461, %v463
          %v465 = vsel %vm464, 1, 0
          %v466 = vcvt.s32.f32 %v465
          %vm467 = vcmask 64512
          %468 = vst.msk [vmem:[#allocation2] sm:$0xff] %vm467, %v459
          %v469 = vsub.f32 1.0, %v459
          %v470 = vadd.f32 %v469, %v466
          %v471 = vmul.f32 %v470, -2.5e+11
          %472 = vst.msk [vmem:[#allocation3] sm:$0xff] %vm467, %v471
        $region60: #{global_pointer_pallas.1} parent=55 // pred_fallthru
          _
        %v473 = vld [vmem:[%s417] sm:$0xf]
        %v474 = vld [vmem:[%s429] sm:$0xf]
        %v475 = vld [vmem:[%s429 + $0x4] sm:$0xf]
        %v476 = vld [vmem:[%s429 + $0x8] sm:$0xf]
        %v477 = vld [vmem:[%s429 + $0xc] sm:$0xf]
        %v478 = vld [vmem:[%s437] sm:$0x1]
        %v480 = vlaneseq
        %v481 = vshrl.u32 %v480, 7
        %v482 = vsub.s32 0, %v481
        %v483 = vrot.slane %v478, %v482
        %v489 = vunpack.c.l.b16 %v474
        %v490 = vunpack.c.l.b16 %v475
        %v491 = vunpack.c.l.b16 %v476
        %v492 = vunpack.c.l.b16 %v477
        %v493 = vpack.c.b16 %v490, %v489
        %v494 = vpack.c.b16 %v492, %v491
        %vm497 = vcmask 261120
        %v499 = vsel %vm497, %v473, 0
        %501 = vmatprep.subr.bf16.mxu0 0
        %502 = vmatpush1.bf16.msra.mxu0 %v493
        %503 = vmatprep.subr.bf16.mxu0 0
        %504 = vmatpush1.bf16.msra.mxu0 %v494
        %505 = vmatprep.subr.bf16.mxu0 0
        %506 = vmatpush1.bf16.msra.mxu0 0
        %507 = vmatprep.subr.bf16.mxu0 0
        %508 = vmatpush1.bf16.msra.mxu0 0
        %509 = vmatprep.subr.bf16.mxu0 0
        %510 = vmatpush1.bf16.msra.mxu0 0
        %511 = vmatprep.subr.bf16.mxu0 0
        %512 = vmatpush1.bf16.msra.mxu0 0
        %513 = vmatprep.subr.bf16.mxu0 0
        %514 = vmatpush1.bf16.msra.mxu0 0
        %515 = vmatprep.subr.bf16.mxu0 0
        %516 = vmatpush1.bf16.msra.mxu0 0
        %517 = vmatprep.subr.bf16.mxu0 0
        %518 = vmatpush1.bf16.msra.mxu0 0
        %519 = vmatprep.subr.bf16.mxu0 0
        %520 = vmatpush1.bf16.msra.mxu0 0
        %521 = vmatprep.subr.bf16.mxu0 0
        %522 = vmatpush1.bf16.msra.mxu0 0
        %523 = vmatprep.subr.bf16.mxu0 0
        %524 = vmatpush1.bf16.msra.mxu0 0
        %525 = vmatprep.subr.bf16.mxu0 0
        %526 = vmatpush1.bf16.msra.mxu0 0
        %527 = vmatprep.subr.bf16.mxu0 0
        %528 = vmatpush1.bf16.msra.mxu0 0
        %529 = vmatprep.subr.bf16.mxu0 0
        %530 = vmatpush1.bf16.msra.mxu0 0
        %531 = vmatprep.subr.bf16.mxu0 0
        %532 = vmatpush1.bf16.msra.mxu0 0
        %533 = vmatprep.mubr.bf16.mxu0 0
        %534 = vmatmul.mubr.bf16.gmra.mrb[0].mxu0 %v499
        %v535 = vpop.f32.mrb[0].mxu0
        %v536 = vadd.f32 %v483, %v535
        %v537 = vpop.f32.mrb[0].mxu0
        %v538 = vpop.f32.mrb[0].mxu0
        %v539 = vpop.f32.mrb[0].mxu0
        %540 = vdwg.mxu0
        %v541 = vld [vmem:[%s434] sm:$0xf]
        %v542 = vld [vmem:[%s434 + $0x4] sm:$0xf]
        %v543 = vld [vmem:[%s434 + $0x8] sm:$0xf]
        %v544 = vld [vmem:[%s434 + $0xc] sm:$0xf]
        %v545 = vld [vmem:[%s440] sm:$0x1]
        %v547 = vlaneseq
        %v548 = vshrl.u32 %v547, 7
        %v549 = vsub.s32 0, %v548
        %v550 = vrot.slane %v545, %v549
        %v556 = vunpack.c.l.b16 %v541
        %v557 = vunpack.c.l.b16 %v542
        %v558 = vunpack.c.l.b16 %v543
        %v559 = vunpack.c.l.b16 %v544
        %v560 = vpack.c.b16 %v557, %v556
        %v561 = vpack.c.b16 %v559, %v558
        %564 = vmatprep.subr.bf16.mxu0 0
        %565 = vmatpush1.bf16.msra.mxu0 %v560
        %566 = vmatprep.subr.bf16.mxu0 0
        %567 = vmatpush1.bf16.msra.mxu0 %v561
        %568 = vmatprep.subr.bf16.mxu0 0
        %569 = vmatpush1.bf16.msra.mxu0 0
        %570 = vmatprep.subr.bf16.mxu0 0
        %571 = vmatpush1.bf16.msra.mxu0 0
        %572 = vmatprep.subr.bf16.mxu0 0
        %573 = vmatpush1.bf16.msra.mxu0 0
        %574 = vmatprep.subr.bf16.mxu0 0
        %575 = vmatpush1.bf16.msra.mxu0 0
        %576 = vmatprep.subr.bf16.mxu0 0
        %577 = vmatpush1.bf16.msra.mxu0 0
        %578 = vmatprep.subr.bf16.mxu0 0
        %579 = vmatpush1.bf16.msra.mxu0 0
        %580 = vmatprep.subr.bf16.mxu0 0
        %581 = vmatpush1.bf16.msra.mxu0 0
        %582 = vmatprep.subr.bf16.mxu0 0
        %583 = vmatpush1.bf16.msra.mxu0 0
        %584 = vmatprep.subr.bf16.mxu0 0
        %585 = vmatpush1.bf16.msra.mxu0 0
        %586 = vmatprep.subr.bf16.mxu0 0
        %587 = vmatpush1.bf16.msra.mxu0 0
        %588 = vmatprep.subr.bf16.mxu0 0
        %589 = vmatpush1.bf16.msra.mxu0 0
        %590 = vmatprep.subr.bf16.mxu0 0
        %591 = vmatpush1.bf16.msra.mxu0 0
        %592 = vmatprep.subr.bf16.mxu0 0
        %593 = vmatpush1.bf16.msra.mxu0 0
        %594 = vmatprep.subr.bf16.mxu0 0
        %595 = vmatpush1.bf16.msra.mxu0 0
        %596 = vmatprep.mubr.bf16.mxu0 0
        %597 = vmatmul.mubr.bf16.gmra.mrb[0].mxu0 %v499
        %v598 = vpop.f32.mrb[0].mxu0
        %v599 = vadd.f32 %v550, %v598
        %v600 = vpop.f32.mrb[0].mxu0
        %v601 = vpop.f32.mrb[0].mxu0
        %v602 = vpop.f32.mrb[0].mxu0
        %603 = vdwg.mxu0
        %v604 = vld [vmem:[%s7] sm:$0xff]
        %v605 = vld [vmem:[%s8] sm:$0xff]
        %v606 = vmul.f32 %v536, %v604
        %vm607 = vcmask 1047680
        %608 = vrot.lane.b32.xlu0 %v536, 16
        %v609 = vpop.permute.xlu0 %608
        %v610 = vsel %vm607, %v609, %v536
        %611 = vrot.lane.b32.xlu0 %v610, 16
        %v612 = vpop.permute.xlu0 %611
        %v613 = vsel %vm607, %v612, %v536
        %615 = vrot.lane.b32.xlu0 %v605, 8
        %v616 = vpop.permute.xlu0 %615
        %v618 = vmul.f32 %v613, %v616
        %620 = vrot.lane.b32.xlu0 %v618, 120
        %v621 = vpop.permute.xlu0 %620
        %v623 = vadd.f32 %v606, %v621
        %v624 = vmul.f32 %v599, %v604
        %625 = vrot.lane.b32.xlu0 %v599, 16
        %v626 = vpop.permute.xlu0 %625
        %v627 = vsel %vm607, %v626, %v599
        %628 = vrot.lane.b32.xlu0 %v627, 16
        %v629 = vpop.permute.xlu0 %628
        %v630 = vsel %vm607, %v629, %v599
        %v631 = vmul.f32 %v630, %v616
        %633 = vrot.lane.b32.xlu0 %v631, 120
        %v634 = vpop.permute.xlu0 %633
        %v636 = vadd.f32 %v624, %v634
        %v637 = vpack.c.bf16 %v623, %v623
        %v638 = vpack.c.bf16 %v636, %v636
        %vm639 = vcmask 130048
        %v641 = vsel %vm639, %v637, 0
        %v644 = vsel %vm639, %v638, 0
        %646 = vmatprep.subr.bf16.mxu0 0
        %647 = vmatpush1.bf16.xpose.msra.mxu0 %v644
        %648 = vmatprep.subr.bf16.mxu0 0
        %649 = vmatpush1.bf16.xpose.msra.mxu0 0
        %650 = vmatprep.subr.bf16.mxu0 0
        %651 = vmatpush1.bf16.xpose.msra.mxu0 0
        %652 = vmatprep.subr.bf16.mxu0 0
        %653 = vmatpush1.bf16.xpose.msra.mxu0 0
        %654 = vmatprep.subr.bf16.mxu0 0
        %655 = vmatpush1.bf16.xpose.msra.mxu0 0
        %656 = vmatprep.subr.bf16.mxu0 0
        %657 = vmatpush1.bf16.xpose.msra.mxu0 0
        %658 = vmatprep.subr.bf16.mxu0 0
        %659 = vmatpush1.bf16.xpose.msra.mxu0 0
        %660 = vmatprep.subr.bf16.mxu0 0
        %661 = vmatpush1.bf16.xpose.msra.mxu0 0
        %662 = vmatprep.subr.bf16.mxu0 0
        %663 = vmatpush1.bf16.xpose.msra.mxu0 0
        %664 = vmatprep.subr.bf16.mxu0 0
        %665 = vmatpush1.bf16.xpose.msra.mxu0 0
        %666 = vmatprep.subr.bf16.mxu0 0
        %667 = vmatpush1.bf16.xpose.msra.mxu0 0
        %668 = vmatprep.subr.bf16.mxu0 0
        %669 = vmatpush1.bf16.xpose.msra.mxu0 0
        %670 = vmatprep.subr.bf16.mxu0 0
        %671 = vmatpush1.bf16.xpose.msra.mxu0 0
        %672 = vmatprep.subr.bf16.mxu0 0
        %673 = vmatpush1.bf16.xpose.msra.mxu0 0
        %674 = vmatprep.subr.bf16.mxu0 0
        %675 = vmatpush1.bf16.xpose.msra.mxu0 0
        %676 = vmatprep.subr.bf16.mxu0 0
        %677 = vmatpush1.bf16.xpose.msra.mxu0 0
        %678 = vmatprep.mubr.bf16.mxu0 0
        %679 = vmatmul.mubr.bf16.gmra.mrb[0].mxu0 %v641
        %v680 = vpop.f32.mrb[0].mxu0
        %v681 = vadd.f32 0.0, %v680
        %v682 = vpop.f32.mrb[0].mxu0
        %v683 = vpop.f32.mrb[0].mxu0
        %v684 = vpop.f32.mrb[0].mxu0
        %685 = vdwg.mxu0
        %v686 = vld [vmem:[#allocation2] sm:$0xff]
        %v687 = vmul.f32 %v681, %v686
        %v688 = vld [vmem:[#allocation3] sm:$0xff]
        %v689 = vadd.f32 %v687, %v688
        %vm690 = vcmask 64512
        %691 = vst.msk [vmem:[%s413] sm:$0xff] %vm690, %v689
        %s692 = sand.u32 %s269, 1
        %s693 = scalar_lea.sflag [#allocation5], %s692
        %s694 = sand.u32 %s269, 1
        %s695 = smul.addr %s694, 8
        %s696 = scalar_lea.vmem [#allocation4], %s695
        // Predicated region
        $region61: #{global_pointer_pallas.1} parent=55 // pred_check
          %p697 = pneg %p279
        $region62: #{global_pointer_pallas.1} parent=55 // pred_check_branch
          %699 = sbr.rel (%p697) target = $region64
        $region63: #{global_pointer_pallas.1} parent=55 // pred_region
          %s701 = ssub.s32 128, 128
          %702 = vsyncadd %s693, %s701
          %s703 = smul.addr %s27, 4
          %s704 = sadd.s32 %s28, %s703
          %s705 = smul.addr %s704, 128
          %s706 = scalar_lea.hbm %s9, %s705
          %s708 = sshll.u32 %s696, 4
          %s709 = int_to_ptr.vmem [resolvable:$true] %s708
          %711 = dma.vmem_to_hbm [thread:$0]  %s709, 128, %s706, %s693
        $region64: #{global_pointer_pallas.1} parent=55 // pred_fallthru
          _
      $region56: #{global_pointer_pallas.1} parent=5 // pred_fallthru
        _
      %p712 = scmp.le.s32.totalorder 2, %s18
      // Predicated region
      $region65: #{global_pointer_pallas.1} parent=5 // pred_check
        %p713 = pneg %p712
      $region66: #{global_pointer_pallas.1} parent=5 // pred_check_branch
        %715 = sbr.rel (%p713) target = $region68
      $region67: #{global_pointer_pallas.1} parent=5 // pred_region
        %s716 = ssub.s32 %s18, 2
        // Predicated region
        $region69: #{global_pointer_pallas.1} parent=67 // pred_check
          %p717 = pneg %p285
        $region70: #{global_pointer_pallas.1} parent=67 // pred_check_branch
          %719 = sbr.rel (%p717) target = $region72
        $region71: #{global_pointer_pallas.1} parent=67 // pred_region
          %s720 = sand.u32 %s270, 1
          %s721 = scalar_lea.sflag [#allocation5], %s720
          %s722 = sand.u32 %s270, 1
          %s723 = smul.addr %s722, 8
          %s724 = scalar_lea.vmem [#allocation4], %s723
          %725 = dma.done %s721, 128
        $region72: #{global_pointer_pallas.1} parent=67 // pred_fallthru
          _
      $region68: #{global_pointer_pallas.1} parent=5 // pred_fallthru
        _
    $region6: #{global_pointer_pallas.1} parent=1 // loop_footer
      %s22 = sadd.s32 1, %s18
    $region7: #{global_pointer_pallas.1} parent=1 // loop_footer_branch
      %17 = sbr.rel target = $region3
    $region8: #{global_pointer_pallas.1} parent=1 // loop_exit
      _
    %726 = vsyncpa [#allocation5], 1
    %s727 = scalar_lea.sflag [#allocation5], 1
    %728 = vsyncpa %s727, 1

</llo_original>
